<compile_context>
chip_gen: v5e
topology: v5e:2x2
jax: 0.10.0
libtpu: 0.0.40
codegen_flags: <defaults>
</compile_context>

<pallas_src>
import functools

import jax
import jax.numpy as jnp
from jax.experimental import pallas as pl
from jax.experimental.pallas import tpu as pltpu


def _mean_nc_kernel(x_ref, o_ref, acc_ref, *, inv_nc, nc_total, nc_tile, mask_rows):
    """One grid step: x_ref (nc_tile, hw_tile); o_ref / acc_ref (1, hw_tile)."""
    k = pl.program_id(1)  # NC (reduction) axis is the last grid axis

    @pl.when(k == 0)
    def _():
        acc_ref[...] = jnp.zeros_like(acc_ref)

    # Cast tile-by-tile on the VPU, accumulate in f32 (XLU cross-sublane sum).
    x = x_ref[...].astype(jnp.float32)
    if mask_rows:
        # Only emitted when NC % nc_tile != 0: zero out rows past the true NC
        # extent (reads in the partial last block return unspecified values).
        row = jax.lax.broadcasted_iota(jnp.int32, x.shape, 0)
        x = jnp.where(k * nc_tile + row < nc_total, x, 0.0)
    acc_ref[...] += jnp.sum(x, axis=0, keepdims=True)

    @pl.when(k == pl.num_programs(1) - 1)
    def _():
        o_ref[...] = (acc_ref[...] * inv_nc).astype(o_ref.dtype)


def _choose_tiles(nc, hw, dtype):
    itemsize = jnp.dtype(dtype).itemsize
    sublane = {4: 8, 2: 16, 1: 32}.get(itemsize, 8)

    # Lane (HW) axis: keep the full extent when modest (full-dim exemption ->
    # no padding / no remainder handling); otherwise tile at a 128-multiple.
    hw_tile = hw if hw <= 8192 else 2048

    # Sublane (NC) axis: largest tile whose double-buffered input block stays
    # within ~8 MiB so the pipeline fits the scoped-VMEM budget everywhere.
    budget = 8 * 1024 * 1024
    max_nc = max(sublane, (budget // (2 * hw_tile * itemsize)) // sublane * sublane)
    nc_tile = nc if nc <= max_nc else max_nc  # full-dim block when it fits
    return nc_tile, hw_tile


def mean_dim01_keepdim(x, force_nc_tile=None):
    """Equivalent of torch.mean(x, (0, 1), keepdim=True) for a 4-D NCHW tensor."""
    N, C, H, W = x.shape
    NC, HW = N * C, H * W

    # Lane-dense 2-D view: reduced axis on sublanes, spatial axis on lanes.
    xf = x.reshape(NC, HW)

    nc_tile, hw_tile = _choose_tiles(NC, HW, x.dtype)
    if force_nc_tile is not None:  # test hook: exercise multi-step / masked path
        nc_tile = min(force_nc_tile, NC)

    grid = (pl.cdiv(HW, hw_tile), pl.cdiv(NC, nc_tile))
    mask_rows = (NC % nc_tile) != 0

    out = pl.pallas_call(
        functools.partial(
            _mean_nc_kernel,
            inv_nc=1.0 / NC,
            nc_total=NC,
            nc_tile=nc_tile,
            mask_rows=mask_rows,
        ),
        out_shape=jax.ShapeDtypeStruct((1, HW), x.dtype),
        grid=grid,
        in_specs=[pl.BlockSpec((nc_tile, hw_tile), lambda j, k: (k, j))],
        out_specs=pl.BlockSpec((1, hw_tile), lambda j, k: (0, j)),
        scratch_shapes=[pltpu.VMEM((1, hw_tile), jnp.float32)],
        compiler_params=pltpu.CompilerParams(
            dimension_semantics=("parallel", "arbitrary"),
            vmem_limit_bytes=32 * 1024 * 1024,
        ),
    )(xf)

    return out.reshape(1, 1, H, W)


def _check(x, atol=1e-5, rtol=1e-5, force_nc_tile=None):
    y = mean_dim01_keepdim(x, force_nc_tile=force_nc_tile)
    jax.block_until_ready(y)
    y_ref = jnp.mean(x.astype(jnp.float32), axis=(0, 1), keepdims=True).astype(x.dtype)
    assert y.shape == (1, 1, x.shape[2], x.shape[3]), y.shape
    assert jnp.allclose(y.astype(jnp.float32), y_ref.astype(jnp.float32),
                        atol=atol, rtol=rtol), (y, y_ref)
    return y


if __name__ == "__main__":
    key = jax.random.PRNGKey(0)
    k0, k1, k2 = jax.random.split(key, 3)

    # 1. Module's canonical input shape: (4, 4, 4, 4) -> single full-dim block.
    x0 = jax.random.uniform(k0, (4, 4, 4, 4), dtype=jnp.float32)
    _check(x0)

    # 2. Odd, non-aligned dims (NC=15, HW=391): full-dim blocks, zero padding.
    x1 = jax.random.uniform(k1, (3, 5, 17, 23), dtype=jnp.float32)
    _check(x1)

    # 3. Multi-step reduction with a partial last NC block (in-kernel row mask).
    x2 = jax.random.uniform(k2, (6, 5, 8, 16), dtype=jnp.float32)
    _check(x2, force_nc_tile=8)

    # 4. bf16 input: native-width DMA, per-tile cast, f32 accumulation.
    x3 = jax.random.uniform(k0, (2, 4, 16, 16)).astype(jnp.bfloat16)
    _check(x3, atol=1e-2, rtol=1e-2)

    # 5. Larger natural multi-chunk case: NC=2048 splits into two k-steps.
    x4 = jax.random.uniform(k1, (16, 128, 8, 128), dtype=jnp.float32)
    _check(x4, atol=1e-4, rtol=1e-4)

    print("KERNEL_OK")
</pallas_src>

<mosaic_0001>
module attributes {stable_mosaic.version = 11 : i64} {
  func.func @_mean_nc_kernel(%arg0: i32, %arg1: i32, %arg2: memref<16x16xf32, #tpu.memory_space<vmem>>, %arg3: memref<1x16xf32, #tpu.memory_space<vmem>>, %arg4: memref<1x16xf32, #tpu.memory_space<vmem>>) attributes {dimension_semantics = [#tpu.dimension_semantics<parallel>, #tpu.dimension_semantics<arbitrary>], iteration_bounds = array<i64: 1, 1>, scalar_prefetch = 0 : i64, scratch_operands = 1 : i64, tpu.core_type = #tpu.core_type<tc>, window_params = [{transform_indices = @transform_0, window_bounds = array<i64: 16, 16>}, {transform_indices = @transform_1, window_bounds = array<i64: 1, 16>}]} {
    %c0_i32 = arith.constant 0 : i32
    %0 = arith.cmpi eq, %arg1, %c0_i32 : i32
    %1 = arith.extui %0 : i1 to i32
    %c0_i32_0 = arith.constant 0 : i32
    %2 = arith.cmpi ne, %1, %c0_i32_0 : i32
    scf.if %2 {
      %cst_8 = arith.constant 0.000000e+00 : f32
      %12 = vector.broadcast %cst_8 : f32 to vector<1x16xf32>
      %c0_9 = arith.constant 0 : index
      %c0_10 = arith.constant 0 : index
      %13 = vector.load %arg4[%c0_9, %c0_10] : memref<1x16xf32, #tpu.memory_space<vmem>>, vector<1x16xf32>
      tpu.vector_store %arg4[%c0_9, %c0_10], %12 {strides = array<i32>} : memref<1x16xf32, #tpu.memory_space<vmem>>, vector<1x16xf32>,
    } else {
    }
    %c0 = arith.constant 0 : index
    %c0_1 = arith.constant 0 : index
    %3 = vector.load %arg2[%c0, %c0_1] : memref<16x16xf32, #tpu.memory_space<vmem>>, vector<16x16xf32>
    %c0_2 = arith.constant 0 : index
    %c0_3 = arith.constant 0 : index
    %4 = vector.load %arg4[%c0_2, %c0_3] : memref<1x16xf32, #tpu.memory_space<vmem>>, vector<1x16xf32>
    %cst = arith.constant dense<0.000000e+00> : vector<16xf32>
    %5 = vector.multi_reduction <add>, %3, %cst [0] : vector<16x16xf32> to vector<16xf32>
    %6 = vector.shape_cast %5 : vector<16xf32> to vector<1x16xf32>
    %7 = arith.addf %4, %6 : vector<1x16xf32>
    %c0_4 = arith.constant 0 : index
    %c0_5 = arith.constant 0 : index
    %8 = vector.load %arg4[%c0_4, %c0_5] : memref<1x16xf32, #tpu.memory_space<vmem>>, vector<1x16xf32>
    tpu.vector_store %arg4[%c0_4, %c0_5], %7 {strides = array<i32>} : memref<1x16xf32, #tpu.memory_space<vmem>>, vector<1x16xf32>,
    %c0_i32_6 = arith.constant 0 : i32
    %9 = arith.cmpi eq, %arg1, %c0_i32_6 : i32
    %10 = arith.extui %9 : i1 to i32
    %c0_i32_7 = arith.constant 0 : i32
    %11 = arith.cmpi ne, %10, %c0_i32_7 : i32
    scf.if %11 {
      %c0_8 = arith.constant 0 : index
      %c0_9 = arith.constant 0 : index
      %12 = vector.load %arg4[%c0_8, %c0_9] : memref<1x16xf32, #tpu.memory_space<vmem>>, vector<1x16xf32>
      %cst_10 = arith.constant 6.250000e-02 : f32
      %13 = vector.broadcast %cst_10 : f32 to vector<1x16xf32>
      %14 = arith.mulf %12, %13 : vector<1x16xf32>
      %c0_11 = arith.constant 0 : index
      %c0_12 = arith.constant 0 : index
      %15 = vector.load %arg3[%c0_11, %c0_12] : memref<1x16xf32, #tpu.memory_space<vmem>>, vector<1x16xf32>
      tpu.vector_store %arg3[%c0_11, %c0_12], %14 {strides = array<i32>} : memref<1x16xf32, #tpu.memory_space<vmem>>, vector<1x16xf32>,
    } else {
    }
    return
  }
  func.func @transform_0(%arg0: i32, %arg1: i32) -> (i32, i32) {
    %c0_i32 = arith.constant 0 : i32
    return %arg1, %arg0 : i32, i32
  }
  func.func @transform_1(%arg0: i32, %arg1: i32) -> (i32, i32) {
    %c0_i32 = arith.constant 0 : i32
    %c0_i32_0 = arith.constant 0 : i32
    return %c0_i32, %arg0 : i32, i32
  }
}

</mosaic_0001>

<llo_original>
// kernel: tpu_custom_call.1
$region0: #{tpu_custom_call.1}
  #allocation0 [shape = 'u32[]', space=smem, size = 0x4, offset = 0x4, fixed_abs, tag = 'smem constant byte address 0x4 - core index']
  #allocation1 [shape = 'u32[72,128]{1,0:T(1,128)}', space=vmem, size = 0x9000, scoped, tag = 'internal scratch']
  #allocation2 [shape = 'f32[1,16]{1,0:T(1,128)}', space=vmem, size = 0x200, scoped, tag = 'scratch operand']
  %s0 = inlined_call_operand.hbm [shape: f32[16,16], index: 0, kind: input, shape index: {}]
  %s1 = inlined_call_operand.hbm [shape: f32[1,16], index: 1, kind: output, shape index: {}]
  %s2 = sld [smem:[#allocation0]]
  $region26: #{tpu_custom_call.1} parent=0
    _
  %s4 = ssub.s32 1, %s2
  %s5 = scalar_select 0, %s4, %s2
  $region1: #{tpu_custom_call.1} parent=0
    #allocation3 [shape = 'u8[8192]{0}', space=vmem, size = 0x2000, scoped, tag = 'input window, operand 0, single buffered']
    #allocation4 [shape = 's32[1]{0}', space=sflag, size = 0x4, scoped, tag = 'scoped memory for tpu_custom_call.1']
    #allocation5 [shape = 's32[1]{0}', space=sflag, size = 0x4, scoped, tag = 'scoped memory for tpu_custom_call.1']
    #allocation6 [shape = 'u8[512]{0}', space=vmem, size = 0x400, scoped, tag = 'output window, operand 0, single buffered']
    %6 = vsyncpa [#allocation4], 0
    %7 = vsyncpa [#allocation5], 0
    // Predicated region
    $region2: #{tpu_custom_call.1} parent=1 // pred_check
      _
    $region3: #{tpu_custom_call.1} parent=1 // pred_check_branch
      %9 = sbr.rel (0) target = $region5
    $region4: #{tpu_custom_call.1} parent=1 // pred_region
      %11 = vsyncadd [#allocation4], 0
      %s12 = sshll.u32 %s0, 4
      %s13 = int_to_ptr.hbm [resolvable:$true] %s12
      %s14 = sshll.u32 [#allocation3], 4
      %s15 = int_to_ptr.vmem [resolvable:$true] %s14
      %20 = dma.hbm_to_vmem [thread:$0]  %s13, 256, %s15, [#allocation4], 128, 128, 8
    $region5: #{tpu_custom_call.1} parent=1 // pred_fallthru
      _
    // Predicated region
    $region6: #{tpu_custom_call.1} parent=1 // pred_check
      _
    $region7: #{tpu_custom_call.1} parent=1 // pred_check_branch
      %22 = sbr.rel (0) target = $region9
    $region8: #{tpu_custom_call.1} parent=1 // pred_region
      %24 = dma.done [#allocation4], 256
    $region9: #{tpu_custom_call.1} parent=1 // pred_fallthru
      _
    %p25 = scmp.eq.s32.totalorder 0, 0
    // Predicated region
    $region10: #{tpu_custom_call.1} parent=1 // pred_check
      %p26 = pneg %p25
    $region11: #{tpu_custom_call.1} parent=1 // pred_check_branch
      %28 = sbr.rel (%p26) target = $region13
    $region12: #{tpu_custom_call.1} parent=1 // pred_region
      %vm29 = vcmask 122880
      %30 = vst.msk [vmem:[#allocation2] sm:$0x1] %vm29, 0.0
    $region13: #{tpu_custom_call.1} parent=1 // pred_fallthru
      _
    %v31 = vld [vmem:[#allocation3] sm:$0xff]
    %v32 = vld [vmem:[#allocation3 + $0x8] sm:$0xff]
    %v33 = vld [vmem:[#allocation2] sm:$0x1]
    %vm34 = vcmask 130048
    %v35 = vsel %vm34, %v31, 0.0
    %v36 = vsel %vm34, %v32, 0.0
    %v37 = vadd.f32 %v35, %v36
    %v38 = vrot.slane %v37, 4
    %v39 = vadd.f32 %v37, %v38
    %v40 = vrot.slane %v39, 2
    %v41 = vadd.f32 %v39, %v40
    %v42 = vrot.slane %v41, 1
    %v43 = vadd.f32 %v41, %v42
    %v44 = vadd.f32 %v33, %v43
    %vm45 = vcmask 122880
    %46 = vst.msk [vmem:[#allocation2] sm:$0x1] %vm45, %v44
    // Predicated region
    $region14: #{tpu_custom_call.1} parent=1 // pred_check
      %p47 = pneg %p25
    $region15: #{tpu_custom_call.1} parent=1 // pred_check_branch
      %49 = sbr.rel (%p47) target = $region17
    $region16: #{tpu_custom_call.1} parent=1 // pred_region
      %v50 = vld [vmem:[#allocation2] sm:$0x1]
      %v51 = vmul.f32 %v50, 0.0625
      %52 = vst.msk [vmem:[#allocation6] sm:$0x1] %vm45, %v51
    $region17: #{tpu_custom_call.1} parent=1 // pred_fallthru
      _
    // Predicated region
    $region18: #{tpu_custom_call.1} parent=1 // pred_check
      _
    $region19: #{tpu_custom_call.1} parent=1 // pred_check_branch
      %54 = sbr.rel (0) target = $region21
    $region20: #{tpu_custom_call.1} parent=1 // pred_region
      %56 = vsyncadd [#allocation5], 0
      %s58 = sshll.u32 [#allocation6], 4
      %s59 = int_to_ptr.vmem [resolvable:$true] %s58
      %s60 = sshll.u32 %s1, 4
      %s61 = int_to_ptr.hbm [resolvable:$true] %s60
      %63 = dma.vmem_to_hbm [thread:$0]  %s59, 16, %s61, [#allocation5]
    $region21: #{tpu_custom_call.1} parent=1 // pred_fallthru
      _
    // Predicated region
    $region22: #{tpu_custom_call.1} parent=1 // pred_check
      _
    $region23: #{tpu_custom_call.1} parent=1 // pred_check_branch
      %65 = sbr.rel (0) target = $region25
    $region24: #{tpu_custom_call.1} parent=1 // pred_region
      %67 = dma.done [#allocation5], 16
    $region25: #{tpu_custom_call.1} parent=1 // pred_fallthru
      _
    %68 = vsyncpa [#allocation4], 1
    %69 = vsyncpa [#allocation5], 1

</llo_original>
